<compile_context>
chip_gen: v7x
topology: tpu7x:2x2x1
jax: 0.10.0
libtpu: 0.0.40
codegen_flags: <defaults>
</compile_context>

<pallas_src>
import functools

import jax
import jax.numpy as jnp
from jax.experimental import pallas as pl
from jax.experimental.pallas import tpu as pltpu


# ---------------------------------------------------------------------------
# Kernels
# ---------------------------------------------------------------------------

def _prepare_kernel(at_ref, pt_ref, r_ref):
    """Transition-matrix preprocessing (runs once per parameter value).

    at_ref : (N, tn)  tile of A^T, so at[k, i] = A[i, k]            (VMEM)
    pt_ref : (N, tn)  Pt[k, i] = exp(T[i, k] - r[i])                (VMEM out)
    r_ref  : (1, tn)  r[i]     = max_k T[i, k]                      (VMEM out)
    """
    at = at_ref[...]                                             # (N, tn) f32
    # log_softmax of A along dim=1  ==  column log_softmax of A^T (axis=0).
    m = jnp.max(at, axis=0, keepdims=True)                       # (1, tn)
    lse = m + jnp.log(jnp.sum(jnp.exp(at - m), axis=0, keepdims=True))
    tt = at - lse                                                # Tt[k,i]=T[i,k]
    r = jnp.max(tt, axis=0, keepdims=True)                       # (1, tn)
    # Guard fully masked (-inf) columns so exp never sees inf - inf.
    r_safe = jnp.where(jnp.isfinite(r), r, 0.0)
    pt_ref[...] = jnp.exp(tt - r_safe)                           # values in [0, 1]
    r_ref[...] = r


def _step_kernel(pt_ref, r_ref, la_ref, out_ref):
    """Per-time-step work: max-shifted exp -> MXU matmul -> log epilogue.

    pt_ref : (N, tn)  precomputed Pt tile                          (VMEM)
    r_ref  : (1, tn)  precomputed row-max of T                     (VMEM)
    la_ref : (tb, N)  log_alpha batch tile                         (VMEM)
    out_ref: (tb, tn) output tile                                  (VMEM)
    """
    la = la_ref[...]                                             # (tb, N) f32
    c = jnp.max(la, axis=1, keepdims=True)                       # (tb, 1)
    c_safe = jnp.where(jnp.isfinite(c), c, 0.0)                  # -inf rows -> -inf out, no NaN
    e = jnp.exp(la - c_safe)                                     # (tb, N), in [0, 1]
    # acc[b, i] = sum_k E[b, k] * Pt[k, i]  -- plain contraction, no transpose.
    acc = jnp.dot(e, pt_ref[...], preferred_element_type=jnp.float32)
    # log(0) -> -inf, (-inf) + (-inf) -> -inf: matches logsumexp of empty mass.
    out_ref[...] = c + r_ref[...] + jnp.log(acc)


# ---------------------------------------------------------------------------
# Tiling / VMEM helpers
# ---------------------------------------------------------------------------

def _pick_tile(total, candidates):
    """Largest lane/sublane-friendly tile that evenly divides `total`;
    fall back to a full-array block (always legal) otherwise."""
    for t in candidates:
        if t < total and total % t == 0:
            return t
    return total


def _vmem_limit_bytes(*block_nbytes):
    # Double-buffered blocks + headroom; keep within v7x's 64 MiB physical VMEM.
    need = 2 * sum(int(b) for b in block_nbytes) + (2 << 20)
    return int(min(max(need, 16 << 20), 64 << 20))


# ---------------------------------------------------------------------------
# Wrappers
# ---------------------------------------------------------------------------

@functools.partial(jax.jit, static_argnums=())
def precompute_transition(unnormalized_transition_matrix):
    """One-time transition-matrix preprocessing -> (Pt, r).

    Cache the result and pass it to transition_step() for every time step of
    an HMM forward pass; the Np^2-scale exp / log_softmax work is then fully
    amortized.
    """
    a = unnormalized_transition_matrix.astype(jnp.float32)
    n = a.shape[0]
    at = a.T                       # fold the transpose out of the kernel (XLU-free)

    tn = _pick_tile(n, (512, 256, 128))
    grid = (n // tn,)
    blk = n * tn * 4

    pt, r = pl.pallas_call(
        _prepare_kernel,
        out_shape=(jax.ShapeDtypeStruct((n, n), jnp.float32),
                   jax.ShapeDtypeStruct((1, n), jnp.float32)),
        grid=grid,
        in_specs=[pl.BlockSpec((n, tn), lambda i: (0, i))],
        out_specs=(pl.BlockSpec((n, tn), lambda i: (0, i)),
                   pl.BlockSpec((1, tn), lambda i: (0, i))),
        compiler_params=pltpu.CompilerParams(
            dimension_semantics=("parallel",),
            vmem_limit_bytes=_vmem_limit_bytes(blk, blk, tn * 4)),
    )(at)
    return pt, r


@functools.partial(jax.jit, static_argnums=())
def transition_step(pt, r, log_alpha):
    """One HMM transition step given the precomputed (Pt, r) cache."""
    la = log_alpha.astype(jnp.float32)
    b, n = la.shape
    assert pt.shape == (n, n) and r.shape == (1, n)

    tn = _pick_tile(n, (512, 256, 128))
    tb = _pick_tile(b, (256, 128))
    # State-tile axis outer, batch-tile axis inner: the Pt block index is
    # constant across batch tiles, so Pt stays VMEM-resident and is DMA'd once
    # per state tile.
    grid = (n // tn, b // tb)

    out = pl.pallas_call(
        _step_kernel,
        out_shape=jax.ShapeDtypeStruct((b, n), jnp.float32),
        grid=grid,
        in_specs=[
            pl.BlockSpec((n, tn), lambda i, j: (0, i)),     # Pt tile
            pl.BlockSpec((1, tn), lambda i, j: (0, i)),     # r tile
            pl.BlockSpec((tb, n), lambda i, j: (j, 0)),     # log_alpha batch tile
        ],
        out_specs=pl.BlockSpec((tb, tn), lambda i, j: (j, i)),
        compiler_params=pltpu.CompilerParams(
            dimension_semantics=("parallel", "parallel"),
            vmem_limit_bytes=_vmem_limit_bytes(
                n * tn * 4, tn * 4, tb * n * 4, tb * tn * 4)),
    )(pt, r, la)
    return out.astype(log_alpha.dtype)


def transition_model_forward(unnormalized_transition_matrix, log_alpha, cache=None):
    """Full TransitionModel.forward(). Pass `cache=precompute_transition(A)`
    to amortize the transition-matrix work across time steps."""
    if cache is None:
        cache = precompute_transition(unnormalized_transition_matrix)
    pt, r = cache
    return transition_step(pt, r, log_alpha)


def transition_model_reference(unnormalized_transition_matrix, log_alpha):
    """Pure-JAX reference mirroring the PyTorch module."""
    t = jax.nn.log_softmax(unnormalized_transition_matrix, axis=1)     # (N, N)
    s = t[None, :, :] + log_alpha[:, None, :]                          # (B, N, N)
    return jax.scipy.special.logsumexp(s, axis=2)                      # (B, N)


# ---------------------------------------------------------------------------
# Self-test
# ---------------------------------------------------------------------------

if __name__ == "__main__":
    key = jax.random.PRNGKey(0)
    k_param, k_alpha = jax.random.split(key)

    N = 16   # number of hidden states
    B = 8    # batch size

    unnormalized_transition_matrix = jax.random.normal(
        k_param, (N, N), dtype=jnp.float32)
    log_alpha = jax.random.normal(k_alpha, (B, N), dtype=jnp.float32)

    # Single forward step (module semantics).
    out = transition_model_forward(unnormalized_transition_matrix, log_alpha)
    out = jax.block_until_ready(out)
    ref = transition_model_reference(unnormalized_transition_matrix, log_alpha)
    assert out.shape == (B, N)
    assert jnp.allclose(out, ref, atol=1e-4, rtol=1e-4), "mismatch vs reference"

    # HMM-style time recursion: precompute (Pt, r) ONCE, reuse every step.
    cache = precompute_transition(unnormalized_transition_matrix)
    la_kern = log_alpha
    la_ref = log_alpha
    for _ in range(3):
        la_kern = transition_step(*cache, la_kern)
        la_ref = transition_model_reference(unnormalized_transition_matrix, la_ref)
    la_kern = jax.block_until_ready(la_kern)
    assert jnp.allclose(la_kern, la_ref, atol=1e-4, rtol=1e-4), \
        "mismatch vs reference in cached time recursion"

    print("KERNEL_OK")
</pallas_src>

<mosaic_0001>
module attributes {stable_mosaic.version = 11 : i64} {
  func.func @_prepare_kernel(%arg0: i32, %arg1: memref<16x16xf32, #tpu.memory_space<vmem>>, %arg2: memref<16x16xf32, #tpu.memory_space<vmem>>, %arg3: memref<1x16xf32, #tpu.memory_space<vmem>>) attributes {dimension_semantics = [#tpu.dimension_semantics<parallel>], iteration_bounds = array<i64: 1>, scalar_prefetch = 0 : i64, scratch_operands = 0 : i64, tpu.core_type = #tpu.core_type<tc>, window_params = [{transform_indices = @transform_0, window_bounds = array<i64: 16, 16>}, {transform_indices = @transform_1, window_bounds = array<i64: 16, 16>}, {transform_indices = @transform_2, window_bounds = array<i64: 1, 16>}]} {
    %c0 = arith.constant 0 : index
    %c0_0 = arith.constant 0 : index
    %0 = vector.load %arg1[%c0, %c0_0] : memref<16x16xf32, #tpu.memory_space<vmem>>, vector<16x16xf32>
    %cst = arith.constant dense<0xFF800000> : vector<16xf32>
    %1 = vector.multi_reduction <maximumf>, %0, %cst [0] : vector<16x16xf32> to vector<16xf32>
    %2 = vector.shape_cast %1 : vector<16xf32> to vector<1x16xf32>
    %3 = vector.broadcast %2 : vector<1x16xf32> to vector<16x16xf32>
    %4 = arith.subf %0, %3 : vector<16x16xf32>
    %5 = math.exp %4 : vector<16x16xf32>
    %cst_1 = arith.constant dense<0.000000e+00> : vector<16xf32>
    %6 = vector.multi_reduction <add>, %5, %cst_1 [0] : vector<16x16xf32> to vector<16xf32>
    %7 = vector.shape_cast %6 : vector<16xf32> to vector<1x16xf32>
    %8 = math.log %7 : vector<1x16xf32>
    %9 = arith.addf %2, %8 : vector<1x16xf32>
    %10 = vector.broadcast %9 : vector<1x16xf32> to vector<16x16xf32>
    %11 = arith.subf %0, %10 : vector<16x16xf32>
    %cst_2 = arith.constant dense<0xFF800000> : vector<16xf32>
    %12 = vector.multi_reduction <maximumf>, %11, %cst_2 [0] : vector<16x16xf32> to vector<16xf32>
    %13 = vector.shape_cast %12 : vector<16xf32> to vector<1x16xf32>
    %14 = tpu.weird %13 : vector<1x16xf32> -> vector<1x16xi1>
    %cst_3 = arith.constant dense<true> : vector<1x16xi1>
    %15 = arith.xori %14, %cst_3 : vector<1x16xi1>
    %cst_4 = arith.constant 0.000000e+00 : f32
    %16 = vector.broadcast %cst_4 : f32 to vector<1x16xf32>
    %17 = arith.select %15, %13, %16 : vector<1x16xi1>, vector<1x16xf32>
    %18 = vector.broadcast %17 : vector<1x16xf32> to vector<16x16xf32>
    %19 = arith.subf %11, %18 : vector<16x16xf32>
    %20 = math.exp %19 : vector<16x16xf32>
    %c0_5 = arith.constant 0 : index
    %c0_6 = arith.constant 0 : index
    %21 = vector.load %arg2[%c0_5, %c0_6] : memref<16x16xf32, #tpu.memory_space<vmem>>, vector<16x16xf32>
    tpu.vector_store %arg2[%c0_5, %c0_6], %20 {strides = array<i32>} : memref<16x16xf32, #tpu.memory_space<vmem>>, vector<16x16xf32>,
    %c0_7 = arith.constant 0 : index
    %c0_8 = arith.constant 0 : index
    %22 = vector.load %arg3[%c0_7, %c0_8] : memref<1x16xf32, #tpu.memory_space<vmem>>, vector<1x16xf32>
    tpu.vector_store %arg3[%c0_7, %c0_8], %13 {strides = array<i32>} : memref<1x16xf32, #tpu.memory_space<vmem>>, vector<1x16xf32>,
    return
  }
  func.func @transform_0(%arg0: i32) -> (i32, i32) {
    %c0_i32 = arith.constant 0 : i32
    %c0_i32_0 = arith.constant 0 : i32
    return %c0_i32, %arg0 : i32, i32
  }
  func.func @transform_1(%arg0: i32) -> (i32, i32) {
    %c0_i32 = arith.constant 0 : i32
    %c0_i32_0 = arith.constant 0 : i32
    return %c0_i32, %arg0 : i32, i32
  }
  func.func @transform_2(%arg0: i32) -> (i32, i32) {
    %c0_i32 = arith.constant 0 : i32
    %c0_i32_0 = arith.constant 0 : i32
    return %c0_i32, %arg0 : i32, i32
  }
}

</mosaic_0001>

<llo_original>
// kernel: precompute_transition.1
$region0: #{precompute_transition.1}
  #allocation0 [shape = 'u32[]', space=smem, size = 0x4, offset = 0x4, fixed_abs, tag = 'smem constant byte address 0x4 - core index']
  #allocation1 [shape = 'u32[144,128]{1,0:T(1,128)}', space=vmem, size = 0x12000, scoped, tag = 'internal scratch']
  %s0 = inlined_call_operand.vmem [shape: f32[16,16], index: 0, kind: input, shape index: {}]
  %s1 = inlined_call_operand.hbm [shape: f32[16,16], index: 1, kind: output, shape index: {0}]
  %s2 = inlined_call_operand.hbm [shape: f32[1,16], index: 2, kind: output, shape index: {1}]
  %3 = xla_tuple %s1, %s2
  %s4 = sld [smem:[#allocation0]]
  $region22: #{precompute_transition.1} parent=0
    _
  %s6 = ssub.s32 1, %s4
  %s7 = scalar_select 0, %s6, %s4
  $region1: #{precompute_transition.1} parent=0
    #allocation2 [shape = 'u8[8192]{0}', space=vmem, size = 0x2000, scoped, tag = 'output window, operand 0, single buffered']
    #allocation3 [shape = 's32[1]{0}', space=sflag, size = 0x4, scoped, tag = 'scoped memory for precompute_transition.1']
    #allocation4 [shape = 'u8[512]{0}', space=vmem, size = 0x400, scoped, tag = 'output window, operand 1, single buffered']
    #allocation5 [shape = 's32[1]{0}', space=sflag, size = 0x4, scoped, tag = 'scoped memory for precompute_transition.1']
    %8 = vsyncpa [#allocation3], 0
    %9 = vsyncpa [#allocation5], 0
    // Predicated region
    $region2: #{precompute_transition.1} parent=1 // pred_check
      _
    $region3: #{precompute_transition.1} parent=1 // pred_check_branch
      %11 = sbr.rel (0) target = $region5
    $region4: #{precompute_transition.1} parent=1 // pred_region
      _
    $region5: #{precompute_transition.1} parent=1 // pred_fallthru
      _
    %v12 = vld [vmem:[%s0] sm:$0xff]
    %v13 = vld [vmem:[%s0 + $0x8] sm:$0xff]
    %vm14 = vcmask 130048
    %v15 = vsel %vm14, %v12, -inf
    %v16 = vsel %vm14, %v13, -inf
    %v17 = vmax.f32 %v15, %v16
    %v18 = vrot.slane %v17, 4
    %v19 = vmax.f32 %v17, %v18
    %v20 = vrot.slane %v19, 2
    %v21 = vmax.f32 %v19, %v20
    %v22 = vrot.slane %v21, 1
    %v23 = vmax.f32 %v21, %v22
    %v24 = vsub.f32 %v12, %v23
    %v25 = vsub.f32 %v13, %v23
    %v26 = vmul.f32 %v24, 1.442695
    %v27 = vpow.pop %v26
    %v28 = vmul.f32 %v25, 1.442695
    %v29 = vpow.pop %v28
    %v30 = vsel %vm14, %v27, 0.0
    %v31 = vsel %vm14, %v29, 0.0
    %v32 = vadd.f32 %v30, %v31
    %v33 = vrot.slane %v32, 4
    %v34 = vadd.f32 %v32, %v33
    %v35 = vrot.slane %v34, 2
    %v36 = vadd.f32 %v34, %v35
    %v37 = vrot.slane %v36, 1
    %v38 = vadd.f32 %v36, %v37
    %v39 = vlog2.pop %v38
    %v40 = vmul.f32 %v39, 0.6931472
    %v41 = vadd.f32 %v23, %v40
    %v42 = vsub.f32 %v12, %v41
    %v43 = vsub.f32 %v13, %v41
    %v44 = vsel %vm14, %v42, -inf
    %v45 = vsel %vm14, %v43, -inf
    %v46 = vmax.f32 %v44, %v45
    %v47 = vrot.slane %v46, 4
    %v48 = vmax.f32 %v46, %v47
    %v49 = vrot.slane %v48, 2
    %v50 = vmax.f32 %v48, %v49
    %v51 = vrot.slane %v50, 1
    %v52 = vmax.f32 %v50, %v51
    %vm53 = vweird.f32 %v52
    %vm54 = vmxor %vm53, 1
    %v55 = vsel %vm54, %v52, 0.0
    %v56 = vsub.f32 %v42, %v55
    %v57 = vsub.f32 %v43, %v55
    %v58 = vmul.f32 %v56, 1.442695
    %v59 = vpow.pop %v58
    %v60 = vmul.f32 %v57, 1.442695
    %v61 = vpow.pop %v60
    %62 = vst.msk [vmem:[#allocation2] sm:$0xff] %vm14, %v59
    %63 = vst.msk [vmem:[#allocation2 + $0x8] sm:$0xff] %vm14, %v61
    %vm64 = vcmask 122880
    %65 = vst.msk [vmem:[#allocation4] sm:$0x1] %vm64, %v52
    // Predicated region
    $region6: #{precompute_transition.1} parent=1 // pred_check
      _
    $region7: #{precompute_transition.1} parent=1 // pred_check_branch
      %67 = sbr.rel (0) target = $region9
    $region8: #{precompute_transition.1} parent=1 // pred_region
      %s69 = ssub.s32 256, 256
      %70 = vsyncadd [#allocation3], %s69
      %s71 = sshll.u32 [#allocation2], 4
      %s72 = int_to_ptr.vmem [resolvable:$true] %s71
      %77 = dma.vmem_to_hbm [thread:$0]  %s72, 256, %s1, [#allocation3], 128, 128, 8
    $region9: #{precompute_transition.1} parent=1 // pred_fallthru
      _
    // Predicated region
    $region10: #{precompute_transition.1} parent=1 // pred_check
      _
    $region11: #{precompute_transition.1} parent=1 // pred_check_branch
      %79 = sbr.rel (0) target = $region13
    $region12: #{precompute_transition.1} parent=1 // pred_region
      %s81 = ssub.s32 16, 16
      %82 = vsyncadd [#allocation5], %s81
      %s84 = sshll.u32 [#allocation4], 4
      %s85 = int_to_ptr.vmem [resolvable:$true] %s84
      %87 = dma.vmem_to_hbm [thread:$0]  %s85, 16, %s2, [#allocation5]
    $region13: #{precompute_transition.1} parent=1 // pred_fallthru
      _
    // Predicated region
    $region14: #{precompute_transition.1} parent=1 // pred_check
      _
    $region15: #{precompute_transition.1} parent=1 // pred_check_branch
      %89 = sbr.rel (0) target = $region17
    $region16: #{precompute_transition.1} parent=1 // pred_region
      %90 = dma.done [#allocation3], 256
    $region17: #{precompute_transition.1} parent=1 // pred_fallthru
      _
    // Predicated region
    $region18: #{precompute_transition.1} parent=1 // pred_check
      _
    $region19: #{precompute_transition.1} parent=1 // pred_check_branch
      %92 = sbr.rel (0) target = $region21
    $region20: #{precompute_transition.1} parent=1 // pred_region
      %93 = dma.done [#allocation5], 16
    $region21: #{precompute_transition.1} parent=1 // pred_fallthru
      _
    %94 = vsyncpa [#allocation3], 1
    %95 = vsyncpa [#allocation5], 1

</llo_original>
